<compile_context>
chip_gen: v7x
topology: tpu7x:2x2x1
jax: 0.10.0
libtpu: 0.0.40
codegen_flags: <defaults>
</compile_context>

<pallas_src>
import functools
import math

import jax
import jax.numpy as jnp
from jax import lax
from jax.experimental import pallas as pl
from jax.experimental.pallas import tpu as pltpu


def _round_up(x: int, m: int) -> int:
    return ((x + m - 1) // m) * m


def _arc_margin_kernel(x_ref, w_ref, o_ref, *, compute_dtype, eps):
    # x_ref: (tb, D) features tile, w_ref: (tc, D) weight tile,
    # o_ref: (tb, tc) cosine output tile.
    x = x_ref[...].astype(jnp.float32)
    w = w_ref[...].astype(jnp.float32)

    # Raw dot product x @ w^T via last-dim contraction on the MXU
    # (no explicit transpose of the weight tile).
    raw = lax.dot_general(
        x.astype(compute_dtype),
        w.astype(compute_dtype),
        dimension_numbers=(((1,), (1,)), ((), ())),
        preferred_element_type=jnp.float32,
    )  # (tb, tc), f32

    # Per-row / per-column inverse norms (f32, EUP rsqrt). Clamping the
    # sum-of-squares at eps^2 is equivalent to F.normalize's max(||v||, eps).
    eps_sq = jnp.float32(eps * eps)
    x_ss = jnp.sum(x * x, axis=-1, keepdims=True)           # (tb, 1)
    w_ss = jnp.sum(w * w, axis=-1, keepdims=True)           # (tc, 1)
    inv_x = lax.rsqrt(jnp.maximum(x_ss, eps_sq))             # (tb, 1)
    inv_w = lax.rsqrt(jnp.maximum(w_ss, eps_sq))             # (tc, 1)

    cosine = raw * inv_x * jnp.transpose(inv_w)              # (tb, tc)
    o_ref[...] = cosine.astype(o_ref.dtype)


def arc_margin_product(
    features: jax.Array,
    weight: jax.Array,
    *,
    compute_dtype=None,
    out_dtype=jnp.float32,
    tb: int | None = None,
    tc: int | None = None,
) -> jax.Array:
    """features: (B, D), weight: (C, D) -> cosine (B, C).

    compute_dtype: dtype of the matmul operands (e.g. jnp.bfloat16 for the
    fast MXU path on v6e/v7x). Accumulation and normalization are f32.
    """
    B, D = features.shape
    C, D2 = weight.shape
    assert D == D2, "in_features mismatch"

    if compute_dtype is None:
        compute_dtype = features.dtype

    # Tile sizes: sublane-aligned B tile, lane-aligned (>=128) C tile.
    if tb is None:
        tb = min(256, _round_up(B, 8))
    if tc is None:
        tc = min(512, _round_up(C, 128))

    B_pad = _round_up(B, tb)
    C_pad = _round_up(C, tc)

    x = features
    w = weight
    if B_pad != B:
        x = jnp.pad(x, ((0, B_pad - B), (0, 0)))
    if C_pad != C:
        w = jnp.pad(w, ((0, C_pad - C), (0, 0)))

    grid = (B_pad // tb, C_pad // tc)

    kernel = functools.partial(
        _arc_margin_kernel, compute_dtype=compute_dtype, eps=1e-12
    )

    n_steps = grid[0] * grid[1]
    itemsize = jnp.dtype(x.dtype).itemsize
    cost = pl.CostEstimate(
        flops=2 * B_pad * C_pad * D,
        transcendentals=n_steps * (tb + tc),  # rsqrt per row/col per tile
        bytes_accessed=(
            grid[1] * B_pad * D * itemsize       # x tiles re-read per C tile
            + grid[0] * C_pad * D * itemsize     # w tiles re-read per B tile
            + B_pad * C_pad * jnp.dtype(out_dtype).itemsize
        ),
    )

    out = pl.pallas_call(
        kernel,
        out_shape=jax.ShapeDtypeStruct((B_pad, C_pad), out_dtype),
        grid_spec=pltpu.PrefetchScalarGridSpec(
            num_scalar_prefetch=0,
            grid=grid,
            in_specs=[
                pl.BlockSpec((tb, D), lambda i, j: (i, 0)),
                pl.BlockSpec((tc, D), lambda i, j: (j, 0)),
            ],
            out_specs=pl.BlockSpec((tb, tc), lambda i, j: (i, j)),
        ),
        compiler_params=pltpu.CompilerParams(
            dimension_semantics=("parallel", "parallel"),
            # Safe on all of v5e/v6e/v7x; tiles here use only a few MiB.
            vmem_limit_bytes=32 * 1024 * 1024,
        ),
        cost_estimate=cost,
    )(x, w)

    if B_pad != B or C_pad != C:
        out = out[:B, :C]
    return out


def init_arc_margin_weight(key, in_features: int, out_features: int) -> jax.Array:
    """Deterministic xavier_uniform_ init matching nn.init.xavier_uniform_."""
    a = math.sqrt(6.0 / (in_features + out_features))
    return jax.random.uniform(
        key, (out_features, in_features), dtype=jnp.float32, minval=-a, maxval=a
    )


def arc_margin_reference(features, weight, eps=1e-12):
    xn = features / jnp.maximum(
        jnp.linalg.norm(features, axis=-1, keepdims=True), eps
    )
    wn = weight / jnp.maximum(
        jnp.linalg.norm(weight, axis=-1, keepdims=True), eps
    )
    return xn @ wn.T


if __name__ == "__main__":
    key = jax.random.PRNGKey(0)
    k_feat, k_w = jax.random.split(key)

    batch = 8
    in_features = 32
    out_features = 16

    features = jax.random.normal(k_feat, (batch, in_features), dtype=jnp.float32)
    weight = init_arc_margin_weight(k_w, in_features, out_features)

    # f32 path (matches PyTorch numerics).
    cosine = arc_margin_product(features, weight)
    jax.block_until_ready(cosine)
    ref = arc_margin_reference(features, weight)
    assert cosine.shape == (batch, out_features)
    assert jnp.allclose(cosine, ref, atol=1e-5, rtol=1e-5), "f32 mismatch vs reference"

    # bf16 MXU-operand fast path (v6e/v7x); looser tolerance.
    cosine_bf16 = arc_margin_product(features, weight, compute_dtype=jnp.bfloat16)
    jax.block_until_ready(cosine_bf16)
    assert jnp.allclose(cosine_bf16, ref, atol=1e-2, rtol=1e-2), "bf16 mismatch"

    # Larger shape that exercises a (2, 2) grid of tiles.
    B2, D2, C2 = 512, 256, 1024
    f2 = jax.random.normal(jax.random.PRNGKey(1), (B2, D2), dtype=jnp.float32)
    w2 = jax.random.normal(jax.random.PRNGKey(2), (C2, D2), dtype=jnp.float32)
    out2 = arc_margin_product(f2, w2)
    jax.block_until_ready(out2)
    ref2 = arc_margin_reference(f2, w2)
    assert out2.shape == (B2, C2)
    assert jnp.allclose(out2, ref2, atol=1e-4, rtol=1e-4), "tiled mismatch"

    print("KERNEL_OK")
</pallas_src>

<mosaic_0001>
module attributes {stable_mosaic.version = 11 : i64} {
  func.func @_arc_margin_kernel(%arg0: i32, %arg1: i32, %arg2: memref<8x32xf32, #tpu.memory_space<vmem>>, %arg3: memref<128x32xf32, #tpu.memory_space<vmem>>, %arg4: memref<8x128xf32, #tpu.memory_space<vmem>>) attributes {dimension_semantics = [#tpu.dimension_semantics<parallel>, #tpu.dimension_semantics<parallel>], iteration_bounds = array<i64: 1, 1>, scalar_prefetch = 0 : i64, scratch_operands = 0 : i64, tpu.core_type = #tpu.core_type<tc>, window_params = [{transform_indices = @transform_0, window_bounds = array<i64: 8, 32>}, {transform_indices = @transform_1, window_bounds = array<i64: 128, 32>}, {transform_indices = @transform_2, window_bounds = array<i64: 8, 128>}]} {
    %c0 = arith.constant 0 : index
    %c0_0 = arith.constant 0 : index
    %0 = vector.load %arg2[%c0, %c0_0] : memref<8x32xf32, #tpu.memory_space<vmem>>, vector<8x32xf32>
    %c0_1 = arith.constant 0 : index
    %c0_2 = arith.constant 0 : index
    %1 = vector.load %arg3[%c0_1, %c0_2] : memref<128x32xf32, #tpu.memory_space<vmem>>, vector<128x32xf32>
    %cst = arith.constant dense<0.000000e+00> : vector<8x128xf32>
    %2 = tpu.matmul %0, %1, %cst {dimension_numbers = #tpu.dot_dimension_numbers<[1], [1], [0], [0], [0, 0, 1, 0], [], []>} : vector<8x32xf32>, vector<128x32xf32>, vector<8x128xf32> -> vector<8x128xf32>
    %3 = arith.mulf %0, %0 : vector<8x32xf32>
    %cst_3 = arith.constant dense<0.000000e+00> : vector<8xf32>
    %4 = vector.multi_reduction <add>, %3, %cst_3 [1] : vector<8x32xf32> to vector<8xf32>
    %5 = vector.shape_cast %4 : vector<8xf32> to vector<8x1xf32>
    %6 = arith.mulf %1, %1 : vector<128x32xf32>
    %cst_4 = arith.constant dense<0.000000e+00> : vector<128xf32>
    %7 = vector.multi_reduction <add>, %6, %cst_4 [1] : vector<128x32xf32> to vector<128xf32>
    %8 = vector.shape_cast %7 : vector<128xf32> to vector<128x1xf32>
    %cst_5 = arith.constant 1.000000e-24 : f32
    %9 = vector.broadcast %cst_5 : f32 to vector<8x1xf32>
    %10 = arith.maximumf %5, %9 : vector<8x1xf32>
    %11 = math.rsqrt %10 : vector<8x1xf32>
    %cst_6 = arith.constant 1.000000e-24 : f32
    %12 = vector.broadcast %cst_6 : f32 to vector<128x1xf32>
    %13 = arith.maximumf %8, %12 : vector<128x1xf32>
    %14 = math.rsqrt %13 : vector<128x1xf32>
    %15 = vector.broadcast %11 : vector<8x1xf32> to vector<8x128xf32>
    %16 = arith.mulf %2, %15 : vector<8x128xf32>
    %17 = tpu.transpose %14, [1, 0] : vector<128x1xf32> -> vector<1x128xf32>
    %18 = vector.broadcast %17 : vector<1x128xf32> to vector<8x128xf32>
    %19 = arith.mulf %16, %18 : vector<8x128xf32>
    %c0_7 = arith.constant 0 : index
    %c0_8 = arith.constant 0 : index
    %20 = vector.load %arg4[%c0_7, %c0_8] : memref<8x128xf32, #tpu.memory_space<vmem>>, vector<8x128xf32>
    tpu.vector_store %arg4[%c0_7, %c0_8], %19 {strides = array<i32>} : memref<8x128xf32, #tpu.memory_space<vmem>>, vector<8x128xf32>,
    return
  }
  func.func @transform_0(%arg0: i32, %arg1: i32) -> (i32, i32) {
    %c0_i32 = arith.constant 0 : i32
    %c0_i32_0 = arith.constant 0 : i32
    return %arg0, %c0_i32 : i32, i32
  }
  func.func @transform_1(%arg0: i32, %arg1: i32) -> (i32, i32) {
    %c0_i32 = arith.constant 0 : i32
    %c0_i32_0 = arith.constant 0 : i32
    return %arg1, %c0_i32 : i32, i32
  }
  func.func @transform_2(%arg0: i32, %arg1: i32) -> (i32, i32) {
    %c0_i32 = arith.constant 0 : i32
    return %arg0, %arg1 : i32, i32
  }
}

</mosaic_0001>

<llo_original>
// kernel: tpu_custom_call.1
$region0: #{tpu_custom_call.1}
  #allocation0 [shape = 'u32[]', space=smem, size = 0x4, offset = 0x4, fixed_abs, tag = 'smem constant byte address 0x4 - core index']
  #allocation1 [shape = 'u32[144,128]{1,0:T(1,128)}', space=vmem, size = 0x12000, scoped, tag = 'internal scratch']
  %s0 = inlined_call_operand.vmem [shape: f32[8,32], index: 0, kind: input, shape index: {}]
  %s1 = inlined_call_operand.vmem [shape: f32[128,32], index: 1, kind: input, shape index: {}]
  %s2 = inlined_call_operand.hbm [shape: f32[8,128], index: 2, kind: output, shape index: {}]
  %s3 = sld [smem:[#allocation0]]
  $region18: #{tpu_custom_call.1} parent=0
    _
  %s5 = ssub.s32 1, %s3
  %s6 = scalar_select 0, %s5, %s3
  $region1: #{tpu_custom_call.1} parent=0
    #allocation2 [shape = 'u8[4096]{0}', space=vmem, size = 0x1000, scoped, tag = 'output window, operand 0, single buffered']
    #allocation3 [shape = 's32[1]{0}', space=sflag, size = 0x4, scoped, tag = 'scoped memory for tpu_custom_call.1']
    %7 = vsyncpa [#allocation3], 0
    // Predicated region
    $region2: #{tpu_custom_call.1} parent=1 // pred_check
      _
    $region3: #{tpu_custom_call.1} parent=1 // pred_check_branch
      %9 = sbr.rel (0) target = $region5
    $region4: #{tpu_custom_call.1} parent=1 // pred_region
      _
    $region5: #{tpu_custom_call.1} parent=1 // pred_fallthru
      _
    // Predicated region
    $region6: #{tpu_custom_call.1} parent=1 // pred_check
      _
    $region7: #{tpu_custom_call.1} parent=1 // pred_check_branch
      %11 = sbr.rel (0) target = $region9
    $region8: #{tpu_custom_call.1} parent=1 // pred_region
      _
    $region9: #{tpu_custom_call.1} parent=1 // pred_fallthru
      _
    %v12 = vld [vmem:[%s0] sm:$0xff]
    %v13 = vld [vmem:[%s1] sm:$0xff]
    %v14 = vld [vmem:[%s1 + $0x8] sm:$0xff]
    %v15 = vld [vmem:[%s1 + $0x10] sm:$0xff]
    %v16 = vld [vmem:[%s1 + $0x18] sm:$0xff]
    %v17 = vld [vmem:[%s1 + $0x20] sm:$0xff]
    %v18 = vld [vmem:[%s1 + $0x28] sm:$0xff]
    %v19 = vld [vmem:[%s1 + $0x30] sm:$0xff]
    %v20 = vld [vmem:[%s1 + $0x38] sm:$0xff]
    %v21 = vld [vmem:[%s1 + $0x40] sm:$0xff]
    %v22 = vld [vmem:[%s1 + $0x48] sm:$0xff]
    %v23 = vld [vmem:[%s1 + $0x50] sm:$0xff]
    %v24 = vld [vmem:[%s1 + $0x58] sm:$0xff]
    %v25 = vld [vmem:[%s1 + $0x60] sm:$0xff]
    %v26 = vld [vmem:[%s1 + $0x68] sm:$0xff]
    %v27 = vld [vmem:[%s1 + $0x70] sm:$0xff]
    %v28 = vld [vmem:[%s1 + $0x78] sm:$0xff]
    %vm29 = vcmask 261120
    %v31 = vsel %vm29, %v12, 0
    %v34 = vsel %vm29, %v13, 0
    %v37 = vsel %vm29, %v14, 0
    %v40 = vsel %vm29, %v15, 0
    %v43 = vsel %vm29, %v16, 0
    %v46 = vsel %vm29, %v17, 0
    %v49 = vsel %vm29, %v18, 0
    %v52 = vsel %vm29, %v19, 0
    %v55 = vsel %vm29, %v20, 0
    %v58 = vsel %vm29, %v21, 0
    %v61 = vsel %vm29, %v22, 0
    %v64 = vsel %vm29, %v23, 0
    %v67 = vsel %vm29, %v24, 0
    %v70 = vsel %vm29, %v25, 0
    %v73 = vsel %vm29, %v26, 0
    %v76 = vsel %vm29, %v27, 0
    %v79 = vsel %vm29, %v28, 0
    %81 = vmatprep.subr.mxu0 0.0
    %82 = vmatpush1.xpose.msra.mxu0 %v34
    %83 = vmatprep.subr.mxu0 0.0
    %84 = vmatpush1.xpose.msra.mxu0 %v37
    %85 = vmatprep.subr.mxu0 0.0
    %86 = vmatpush1.xpose.msra.mxu0 %v40
    %87 = vmatprep.subr.mxu0 0.0
    %88 = vmatpush1.xpose.msra.mxu0 %v43
    %89 = vmatprep.subr.mxu0 0.0
    %90 = vmatpush1.xpose.msra.mxu0 %v46
    %91 = vmatprep.subr.mxu0 0.0
    %92 = vmatpush1.xpose.msra.mxu0 %v49
    %93 = vmatprep.subr.mxu0 0.0
    %94 = vmatpush1.xpose.msra.mxu0 %v52
    %95 = vmatprep.subr.mxu0 0.0
    %96 = vmatpush1.xpose.msra.mxu0 %v55
    %97 = vmatprep.subr.mxu0 0.0
    %98 = vmatpush1.xpose.msra.mxu0 %v58
    %99 = vmatprep.subr.mxu0 0.0
    %100 = vmatpush1.xpose.msra.mxu0 %v61
    %101 = vmatprep.subr.mxu0 0.0
    %102 = vmatpush1.xpose.msra.mxu0 %v64
    %103 = vmatprep.subr.mxu0 0.0
    %104 = vmatpush1.xpose.msra.mxu0 %v67
    %105 = vmatprep.subr.mxu0 0.0
    %106 = vmatpush1.xpose.msra.mxu0 %v70
    %107 = vmatprep.subr.mxu0 0.0
    %108 = vmatpush1.xpose.msra.mxu0 %v73
    %109 = vmatprep.subr.mxu0 0.0
    %110 = vmatpush1.xpose.msra.mxu0 %v76
    %111 = vmatprep.subr.mxu0 0.0
    %112 = vmatpush1.xpose.msra.mxu0 %v79
    %113 = vmatprep.subr.mxu0 0.0
    %114 = vmatpush1.xpose.msra.mxu0 0.0
    %115 = vmatprep.subr.mxu0 0.0
    %116 = vmatpush1.xpose.msra.mxu0 0.0
    %117 = vmatprep.subr.mxu0 0.0
    %118 = vmatpush1.xpose.msra.mxu0 0.0
    %119 = vmatprep.subr.mxu0 0.0
    %120 = vmatpush1.xpose.msra.mxu0 0.0
    %121 = vmatprep.subr.mxu0 0.0
    %122 = vmatpush1.xpose.msra.mxu0 0.0
    %123 = vmatprep.subr.mxu0 0.0
    %124 = vmatpush1.xpose.msra.mxu0 0.0
    %125 = vmatprep.subr.mxu0 0.0
    %126 = vmatpush1.xpose.msra.mxu0 0.0
    %127 = vmatprep.subr.mxu0 0.0
    %128 = vmatpush1.xpose.msra.mxu0 0.0
    %129 = vmatprep.subr.mxu0 0.0
    %130 = vmatpush1.xpose.msra.mxu0 0.0
    %131 = vmatprep.subr.mxu0 0.0
    %132 = vmatpush1.xpose.msra.mxu0 0.0
    %133 = vmatprep.subr.mxu0 0.0
    %134 = vmatpush1.xpose.msra.mxu0 0.0
    %135 = vmatprep.subr.mxu0 0.0
    %136 = vmatpush1.xpose.msra.mxu0 0.0
    %137 = vmatprep.subr.mxu0 0.0
    %138 = vmatpush1.xpose.msra.mxu0 0.0
    %139 = vmatprep.subr.mxu0 0.0
    %140 = vmatpush1.xpose.msra.mxu0 0.0
    %141 = vmatprep.subr.mxu0 0.0
    %142 = vmatpush1.xpose.msra.mxu0 0.0
    %143 = vmatprep.subr.mxu0 0.0
    %144 = vmatpush1.xpose.msra.mxu0 0.0
    %145 = vmatprep.mubr.f32.mxu0 0.0
    %146 = vmatmul.mubr.f32.gmra.mrb[0].mxu0 %v31
    %v147 = vpop.f32.mrb[0].mxu0
    %v148 = vadd.f32 0.0, %v147
    %v149 = vpop.f32.mrb[0].mxu0
    %150 = vdwg.mxu0
    %v151 = vmul.f32 %v12, %v12
    %v152 = vsel %vm29, %v151, 0.0
    %153 = vadd.xlane.f32.xlu0 %v152
    %v154 = vpop.xlane.xlu0 %153
    %v155 = vmul.f32 %v13, %v13
    %v156 = vmul.f32 %v14, %v14
    %v157 = vmul.f32 %v15, %v15
    %v158 = vmul.f32 %v16, %v16
    %v159 = vmul.f32 %v17, %v17
    %v160 = vmul.f32 %v18, %v18
    %v161 = vmul.f32 %v19, %v19
    %v162 = vmul.f32 %v20, %v20
    %v163 = vmul.f32 %v21, %v21
    %v164 = vmul.f32 %v22, %v22
    %v165 = vmul.f32 %v23, %v23
    %v166 = vmul.f32 %v24, %v24
    %v167 = vmul.f32 %v25, %v25
    %v168 = vmul.f32 %v26, %v26
    %v169 = vmul.f32 %v27, %v27
    %v170 = vmul.f32 %v28, %v28
    %v171 = vsel %vm29, %v155, 0.0
    %172 = vadd.xlane.f32.xlu0 %v171
    %v173 = vpop.xlane.xlu0 %172
    %v174 = vsel %vm29, %v156, 0.0
    %175 = vadd.xlane.f32.xlu0 %v174
    %v176 = vpop.xlane.xlu0 %175
    %v177 = vsel %vm29, %v157, 0.0
    %178 = vadd.xlane.f32.xlu0 %v177
    %v179 = vpop.xlane.xlu0 %178
    %v180 = vsel %vm29, %v158, 0.0
    %181 = vadd.xlane.f32.xlu0 %v180
    %v182 = vpop.xlane.xlu0 %181
    %v183 = vsel %vm29, %v159, 0.0
    %184 = vadd.xlane.f32.xlu0 %v183
    %v185 = vpop.xlane.xlu0 %184
    %v186 = vsel %vm29, %v160, 0.0
    %187 = vadd.xlane.f32.xlu0 %v186
    %v188 = vpop.xlane.xlu0 %187
    %v189 = vsel %vm29, %v161, 0.0
    %190 = vadd.xlane.f32.xlu0 %v189
    %v191 = vpop.xlane.xlu0 %190
    %v192 = vsel %vm29, %v162, 0.0
    %193 = vadd.xlane.f32.xlu0 %v192
    %v194 = vpop.xlane.xlu0 %193
    %v195 = vsel %vm29, %v163, 0.0
    %196 = vadd.xlane.f32.xlu0 %v195
    %v197 = vpop.xlane.xlu0 %196
    %v198 = vsel %vm29, %v164, 0.0
    %199 = vadd.xlane.f32.xlu0 %v198
    %v200 = vpop.xlane.xlu0 %199
    %v201 = vsel %vm29, %v165, 0.0
    %202 = vadd.xlane.f32.xlu0 %v201
    %v203 = vpop.xlane.xlu0 %202
    %v204 = vsel %vm29, %v166, 0.0
    %205 = vadd.xlane.f32.xlu0 %v204
    %v206 = vpop.xlane.xlu0 %205
    %v207 = vsel %vm29, %v167, 0.0
    %208 = vadd.xlane.f32.xlu0 %v207
    %v209 = vpop.xlane.xlu0 %208
    %v210 = vsel %vm29, %v168, 0.0
    %211 = vadd.xlane.f32.xlu0 %v210
    %v212 = vpop.xlane.xlu0 %211
    %v213 = vsel %vm29, %v169, 0.0
    %214 = vadd.xlane.f32.xlu0 %v213
    %v215 = vpop.xlane.xlu0 %214
    %v216 = vsel %vm29, %v170, 0.0
    %217 = vadd.xlane.f32.xlu0 %v216
    %v218 = vpop.xlane.xlu0 %217
    %v219 = vmax.f32 %v154, 1e-24
    %v220 = vrsqrt.pop %v219
    %v221 = vmax.f32 %v173, 1e-24
    %v222 = vmax.f32 %v176, 1e-24
    %v223 = vmax.f32 %v179, 1e-24
    %v224 = vmax.f32 %v182, 1e-24
    %v225 = vmax.f32 %v185, 1e-24
    %v226 = vmax.f32 %v188, 1e-24
    %v227 = vmax.f32 %v191, 1e-24
    %v228 = vmax.f32 %v194, 1e-24
    %v229 = vmax.f32 %v197, 1e-24
    %v230 = vmax.f32 %v200, 1e-24
    %v231 = vmax.f32 %v203, 1e-24
    %v232 = vmax.f32 %v206, 1e-24
    %v233 = vmax.f32 %v209, 1e-24
    %v234 = vmax.f32 %v212, 1e-24
    %v235 = vmax.f32 %v215, 1e-24
    %v236 = vmax.f32 %v218, 1e-24
    %v237 = vrsqrt.pop %v221
    %v238 = vrsqrt.pop %v222
    %v239 = vrsqrt.pop %v223
    %v240 = vrsqrt.pop %v224
    %v241 = vrsqrt.pop %v225
    %v242 = vrsqrt.pop %v226
    %v243 = vrsqrt.pop %v227
    %v244 = vrsqrt.pop %v228
    %v245 = vrsqrt.pop %v229
    %v246 = vrsqrt.pop %v230
    %v247 = vrsqrt.pop %v231
    %v248 = vrsqrt.pop %v232
    %v249 = vrsqrt.pop %v233
    %v250 = vrsqrt.pop %v234
    %v251 = vrsqrt.pop %v235
    %v252 = vrsqrt.pop %v236
    %v253 = vmul.f32 %v148, %v220
    %254 = vxpose.xlu0.b32.start [1/16] %v237, 128
    %255 = vxpose.xlu0.b32.cont [2/16] %v238, 128
    %256 = vxpose.xlu0.b32.cont [3/16] %v239, 128
    %257 = vxpose.xlu0.b32.cont [4/16] %v240, 128
    %258 = vxpose.xlu0.b32.cont [5/16] %v241, 128
    %259 = vxpose.xlu0.b32.cont [6/16] %v242, 128
    %260 = vxpose.xlu0.b32.cont [7/16] %v243, 128
    %261 = vxpose.xlu0.b32.cont [8/16] %v244, 128
    %262 = vxpose.xlu0.b32.cont [9/16] %v245, 128
    %263 = vxpose.xlu0.b32.cont [10/16] %v246, 128
    %264 = vxpose.xlu0.b32.cont [11/16] %v247, 128
    %265 = vxpose.xlu0.b32.cont [12/16] %v248, 128
    %266 = vxpose.xlu0.b32.cont [13/16] %v249, 128
    %267 = vxpose.xlu0.b32.cont [14/16] %v250, 128
    %268 = vxpose.xlu0.b32.cont [15/16] %v251, 128
    %269 = vxpose.xlu0.b32.end [16/16] %v252, 128
    %v270 = vpop.trf.xlu0
    %v271 = vpop.trf.xlu0
    %v272 = vpop.trf.xlu0
    %v273 = vpop.trf.xlu0
    %v274 = vpop.trf.xlu0
    %v275 = vpop.trf.xlu0
    %v276 = vpop.trf.xlu0
    %v277 = vpop.trf.xlu0
    %v278 = vpop.trf.xlu0
    %v279 = vpop.trf.xlu0
    %v280 = vpop.trf.xlu0
    %v281 = vpop.trf.xlu0
    %v282 = vpop.trf.xlu0
    %v283 = vpop.trf.xlu0
    %v284 = vpop.trf.xlu0
    %v285 = vpop.trf.xlu0
    %v286 = vlaneseq
    %v287 = vshrl.u32 %v286, 7
    %v288 = vsub.s32 0, %v287
    %v289 = vrot.slane %v270, %v288
    %v290 = vmul.f32 %v253, %v289
    %291 = vst [vmem:[#allocation2] sm:$0xff] %v290
    // Predicated region
    $region10: #{tpu_custom_call.1} parent=1 // pred_check
      _
    $region11: #{tpu_custom_call.1} parent=1 // pred_check_branch
      %293 = sbr.rel (0) target = $region13
    $region12: #{tpu_custom_call.1} parent=1 // pred_region
      %s295 = ssub.s32 128, 128
      %296 = vsyncadd [#allocation3], %s295
      %s298 = sshll.u32 [#allocation2], 4
      %s299 = int_to_ptr.vmem [resolvable:$true] %s298
      %301 = dma.vmem_to_hbm [thread:$0]  %s299, 128, %s2, [#allocation3]
    $region13: #{tpu_custom_call.1} parent=1 // pred_fallthru
      _
    // Predicated region
    $region14: #{tpu_custom_call.1} parent=1 // pred_check
      _
    $region15: #{tpu_custom_call.1} parent=1 // pred_check_branch
      %303 = sbr.rel (0) target = $region17
    $region16: #{tpu_custom_call.1} parent=1 // pred_region
      %304 = dma.done [#allocation3], 128
    $region17: #{tpu_custom_call.1} parent=1 // pred_fallthru
      _
    %305 = vsyncpa [#allocation3], 1

</llo_original>
